<compile_context>
chip_gen: v6e
topology: v6e:2x2x1
jax: 0.10.0
libtpu: 0.0.40
codegen_flags: <defaults>
</compile_context>

<pallas_src>
import jax
import jax.numpy as jnp
from jax.experimental import pallas as pl
from jax.experimental.pallas import tpu as pltpu

LANE = 128


def _round_up(n, m):
    return ((n + m - 1) // m) * m


# ----------------------------------------------------------------------------- kernel
def _make_nbeats_kernel(n_hidden, apply_mask):
    """Kernel over one (TB, *) batch tile. refs = x [, mask], (w,b)*n_hidden,
    fused-theta (w,b), fused-basis (w,b), out."""

    def kernel(*refs):
        out_ref = refs[-1]
        it = iter(refs[:-1])
        x_ref = next(it)
        mask_ref = next(it) if apply_mask else None

        h = x_ref[...]
        # hidden MLP: Linear -> ReLU  (MXU matmuls, f32 accumulation)
        for _ in range(n_hidden):
            w_ref = next(it)
            b_ref = next(it)
            w = w_ref[...]
            h = jnp.dot(h.astype(w.dtype), w,
                        preferred_element_type=jnp.float32) + b_ref[...]
            h = jnp.maximum(h, 0.0)

        # fused theta projection: [theta_f | theta_b] in one matmul
        wt_ref = next(it)
        bt_ref = next(it)
        wt = wt_ref[...]
        theta = jnp.dot(h.astype(wt.dtype), wt,
                        preferred_element_type=jnp.float32) + bt_ref[...]

        # fused basis expansion: block-diagonal [wfb 0; 0 wbb] -> [forecast | backcast]
        wb_ref = next(it)
        bb_ref = next(it)
        wb = wb_ref[...]
        out = jnp.dot(theta.astype(wb.dtype), wb,
                      preferred_element_type=jnp.float32) + bb_ref[...]

        if apply_mask:
            out = out * mask_ref[...]          # [y_mask | x_mask] slab

        out_ref[...] = out.astype(out_ref.dtype)

    return kernel


# ----------------------------------------------------------------------------- params
def init_block_params(key, forecast_len, backcast_len,
                      theta_forecast_dim, theta_backcast_dim, hidden_dims):
    """nn.Linear-style init. Weights stored (in_dim, out_dim); biases (out_dim,).
    Order: hidden layers, theta_forecast, theta_backcast, forecast_basis, backcast_basis."""
    fc_dims = [backcast_len] + list(hidden_dims)
    layer_dims = [(fc_dims[i], fc_dims[i + 1]) for i in range(len(fc_dims) - 1)]
    layer_dims += [
        (fc_dims[-1], theta_forecast_dim),
        (fc_dims[-1], theta_backcast_dim),
        (theta_forecast_dim, forecast_len),
        (theta_backcast_dim, backcast_len),
    ]
    params = []
    for (din, dout) in layer_dims:
        key, kw, kb = jax.random.split(key, 3)
        bound = 1.0 / (din ** 0.5)
        w = jax.random.uniform(kw, (din, dout), jnp.float32, -bound, bound)
        b = jax.random.uniform(kb, (dout,), jnp.float32, -bound, bound)
        params += [w, b]
    return params


def pack_block_params(params, forecast_len, backcast_len,
                      theta_forecast_dim, theta_backcast_dim, hidden_dims,
                      param_dtype=jnp.float32):
    """One-time weight prep: pad every feature dim to a multiple of 128 lanes,
    fuse the two theta projections (column concat) and the two basis projections
    (block diagonal). param_dtype=jnp.bfloat16 halves weight VMEM/HBM traffic on
    v6e/v7x (accumulation stays f32)."""
    n_hidden = len(hidden_dims)
    ws = params[0::2]
    bs = params[1::2]

    in_dims = [backcast_len] + list(hidden_dims)
    in_pads = [_round_up(d, LANE) for d in in_dims]

    packed = []
    for l in range(n_hidden):
        din, dout = ws[l].shape
        wp = jnp.zeros((in_pads[l], in_pads[l + 1]), param_dtype)
        wp = wp.at[:din, :dout].set(ws[l].astype(param_dtype))
        bp = jnp.zeros((1, in_pads[l + 1]), jnp.float32)
        bp = bp.at[0, :dout].set(bs[l])
        packed += [wp, bp]

    h_last = hidden_dims[-1]
    h_pad = in_pads[-1]
    tf, tb = theta_forecast_dim, theta_backcast_dim
    theta_pad = _round_up(tf + tb, LANE)
    out_pad = _round_up(forecast_len + backcast_len, LANE)

    wtf, btf = ws[n_hidden], bs[n_hidden]
    wtb, btb = ws[n_hidden + 1], bs[n_hidden + 1]
    wt = jnp.zeros((h_pad, theta_pad), param_dtype)
    wt = wt.at[:h_last, :tf].set(wtf.astype(param_dtype))
    wt = wt.at[:h_last, tf:tf + tb].set(wtb.astype(param_dtype))
    bt = jnp.zeros((1, theta_pad), jnp.float32)
    bt = bt.at[0, :tf].set(btf).at[0, tf:tf + tb].set(btb)

    wfb, bfb = ws[n_hidden + 2], bs[n_hidden + 2]
    wbb, bbb = ws[n_hidden + 3], bs[n_hidden + 3]
    wb = jnp.zeros((theta_pad, out_pad), param_dtype)
    wb = wb.at[:tf, :forecast_len].set(wfb.astype(param_dtype))
    wb = wb.at[tf:tf + tb, forecast_len:forecast_len + backcast_len].set(
        wbb.astype(param_dtype))
    bb = jnp.zeros((1, out_pad), jnp.float32)
    bb = bb.at[0, :forecast_len].set(bfb)
    bb = bb.at[0, forecast_len:forecast_len + backcast_len].set(bbb)

    packed += [wt, bt, wb, bb]
    meta = dict(n_hidden=n_hidden,
                in_pad=in_pads[0],
                forecast_len=forecast_len,
                backcast_len=backcast_len,
                out_pad=out_pad)
    return packed, meta


# ----------------------------------------------------------------------------- wrapper
def nbeats_block_forward(x, x_mask, y_mask, packed, meta, block_rows=256):
    """Runs the full Block forward inside one pallas_call, tiled over batch."""
    B, bl = x.shape
    F = meta["forecast_len"]
    Bc = meta["backcast_len"]
    in_pad = meta["in_pad"]
    out_pad = meta["out_pad"]
    n_hidden = meta["n_hidden"]
    apply_mask = x_mask is not None

    w_dtype = packed[0].dtype

    # batch tile: >=256 rows at production batch; multiple of 8 always.
    TB = min(int(block_rows), _round_up(B, 8))
    B_pad = _round_up(B, TB)
    grid = (B_pad // TB,)

    # pad x (zeros in padded lanes/rows keep the math exact)
    xp = jnp.zeros((B_pad, in_pad), w_dtype).at[:B, :bl].set(x.astype(w_dtype))

    inputs = [xp]
    in_specs = [pl.BlockSpec((TB, in_pad), lambda i: (i, 0))]

    if apply_mask:
        # combined [y_mask | x_mask] slab, lane-padded
        mp = jnp.zeros((B_pad, out_pad), jnp.float32)
        mp = mp.at[:B, :F].set(y_mask.astype(jnp.float32))
        mp = mp.at[:B, F:F + Bc].set(x_mask.astype(jnp.float32))
        inputs.append(mp)
        in_specs.append(pl.BlockSpec((TB, out_pad), lambda i: (i, 0)))

    # weights / biases: VMEM-resident (constant block index across the grid)
    for p in packed:
        inputs.append(p)
        in_specs.append(pl.BlockSpec(p.shape, lambda i: (0, 0)))

    # advisory cost hint for XLA scheduling
    flops = int(sum(2 * B_pad * w.shape[0] * w.shape[1] for w in packed[0::2]))
    bytes_accessed = int(sum(a.size * a.dtype.itemsize for a in inputs)
                         + B_pad * out_pad * 4)

    kernel = _make_nbeats_kernel(n_hidden, apply_mask)

    out = pl.pallas_call(
        kernel,
        out_shape=jax.ShapeDtypeStruct((B_pad, out_pad), jnp.float32),
        grid=grid,
        in_specs=in_specs,
        out_specs=pl.BlockSpec((TB, out_pad), lambda i: (i, 0)),
        compiler_params=pltpu.CompilerParams(
            dimension_semantics=("parallel",)),   # megacore split on v7x
        cost_estimate=pl.CostEstimate(flops=flops,
                                      transcendentals=0,
                                      bytes_accessed=bytes_accessed),
    )(*inputs)

    forecast = out[:B, :F]
    backcast = out[:B, F:F + Bc]
    return forecast, backcast


# ----------------------------------------------------------------------------- reference
def nbeats_block_reference(x, x_mask, y_mask, params, n_hidden):
    ws = params[0::2]
    bs = params[1::2]
    h = x
    for l in range(n_hidden):
        h = jnp.maximum(h @ ws[l] + bs[l], 0.0)
    theta_f = h @ ws[n_hidden] + bs[n_hidden]
    theta_b = h @ ws[n_hidden + 1] + bs[n_hidden + 1]
    forecast = theta_f @ ws[n_hidden + 2] + bs[n_hidden + 2]
    backcast = theta_b @ ws[n_hidden + 3] + bs[n_hidden + 3]
    if x_mask is not None:
        return forecast * y_mask, backcast * x_mask
    return forecast, backcast


# ----------------------------------------------------------------------------- main
if __name__ == "__main__":
    batch = 8
    backcast_len = 16
    forecast_len = 8
    theta_forecast_dim = 4
    theta_backcast_dim = 4
    hidden_dims = [32, 64, 64, 128]

    key = jax.random.PRNGKey(0)
    key, kx, kxm, kym = jax.random.split(key, 4)

    params = init_block_params(key, forecast_len, backcast_len,
                               theta_forecast_dim, theta_backcast_dim,
                               hidden_dims)
    # f32 weights here so the correctness check is tight; pass
    # param_dtype=jnp.bfloat16 for the v6e/v7x fast path in production.
    packed, meta = pack_block_params(params, forecast_len, backcast_len,
                                     theta_forecast_dim, theta_backcast_dim,
                                     hidden_dims, param_dtype=jnp.float32)

    x = jax.random.normal(kx, (batch, backcast_len), jnp.float32)
    x_mask = (jax.random.uniform(kxm, (batch, backcast_len)) > 0.3).astype(jnp.float32)
    y_mask = (jax.random.uniform(kym, (batch, forecast_len)) > 0.3).astype(jnp.float32)

    # masked path
    forecast, backcast = nbeats_block_forward(x, x_mask, y_mask, packed, meta)
    forecast, backcast = jax.block_until_ready((forecast, backcast))
    ref_f, ref_b = nbeats_block_reference(x, x_mask, y_mask, params, len(hidden_dims))
    assert forecast.shape == (batch, forecast_len)
    assert backcast.shape == (batch, backcast_len)
    assert jnp.allclose(forecast, ref_f, atol=1e-5, rtol=1e-5)
    assert jnp.allclose(backcast, ref_b, atol=1e-5, rtol=1e-5)

    # mask-free path (x_mask is None branch of the PyTorch module)
    f2, b2 = nbeats_block_forward(x, None, None, packed, meta)
    f2, b2 = jax.block_until_ready((f2, b2))
    rf2, rb2 = nbeats_block_reference(x, None, None, params, len(hidden_dims))
    assert jnp.allclose(f2, rf2, atol=1e-5, rtol=1e-5)
    assert jnp.allclose(b2, rb2, atol=1e-5, rtol=1e-5)

    print("KERNEL_OK")
</pallas_src>

<mosaic_0001>
module attributes {stable_mosaic.version = 11 : i64} {
  func.func @kernel(%arg0: i32, %arg1: memref<8x128xf32, #tpu.memory_space<vmem>>, %arg2: memref<8x128xf32, #tpu.memory_space<vmem>>, %arg3: memref<128x128xf32, #tpu.memory_space<vmem>>, %arg4: memref<1x128xf32, #tpu.memory_space<vmem>>, %arg5: memref<128x128xf32, #tpu.memory_space<vmem>>, %arg6: memref<1x128xf32, #tpu.memory_space<vmem>>, %arg7: memref<128x128xf32, #tpu.memory_space<vmem>>, %arg8: memref<1x128xf32, #tpu.memory_space<vmem>>, %arg9: memref<128x128xf32, #tpu.memory_space<vmem>>, %arg10: memref<1x128xf32, #tpu.memory_space<vmem>>, %arg11: memref<128x128xf32, #tpu.memory_space<vmem>>, %arg12: memref<1x128xf32, #tpu.memory_space<vmem>>, %arg13: memref<128x128xf32, #tpu.memory_space<vmem>>, %arg14: memref<1x128xf32, #tpu.memory_space<vmem>>, %arg15: memref<8x128xf32, #tpu.memory_space<vmem>>) attributes {dimension_semantics = [#tpu.dimension_semantics<parallel>], iteration_bounds = array<i64: 1>, scalar_prefetch = 0 : i64, scratch_operands = 0 : i64, tpu.core_type = #tpu.core_type<tc>, window_params = [{transform_indices = @transform_0, window_bounds = array<i64: 8, 128>}, {transform_indices = @transform_1, window_bounds = array<i64: 8, 128>}, {pipeline_mode = #tpu.pipeline_mode<synchronous>, transform_indices = @transform_2, window_bounds = array<i64: 128, 128>}, {pipeline_mode = #tpu.pipeline_mode<synchronous>, transform_indices = @transform_3, window_bounds = array<i64: 1, 128>}, {pipeline_mode = #tpu.pipeline_mode<synchronous>, transform_indices = @transform_4, window_bounds = array<i64: 128, 128>}, {pipeline_mode = #tpu.pipeline_mode<synchronous>, transform_indices = @transform_5, window_bounds = array<i64: 1, 128>}, {pipeline_mode = #tpu.pipeline_mode<synchronous>, transform_indices = @transform_6, window_bounds = array<i64: 128, 128>}, {pipeline_mode = #tpu.pipeline_mode<synchronous>, transform_indices = @transform_7, window_bounds = array<i64: 1, 128>}, {pipeline_mode = #tpu.pipeline_mode<synchronous>, transform_indices = @transform_8, window_bounds = array<i64: 128, 128>}, {pipeline_mode = #tpu.pipeline_mode<synchronous>, transform_indices = @transform_9, window_bounds = array<i64: 1, 128>}, {pipeline_mode = #tpu.pipeline_mode<synchronous>, transform_indices = @transform_10, window_bounds = array<i64: 128, 128>}, {pipeline_mode = #tpu.pipeline_mode<synchronous>, transform_indices = @transform_11, window_bounds = array<i64: 1, 128>}, {pipeline_mode = #tpu.pipeline_mode<synchronous>, transform_indices = @transform_12, window_bounds = array<i64: 128, 128>}, {pipeline_mode = #tpu.pipeline_mode<synchronous>, transform_indices = @transform_13, window_bounds = array<i64: 1, 128>}, {transform_indices = @transform_14, window_bounds = array<i64: 8, 128>}]} {
    %c0 = arith.constant 0 : index
    %c0_0 = arith.constant 0 : index
    %0 = vector.load %arg1[%c0, %c0_0] : memref<8x128xf32, #tpu.memory_space<vmem>>, vector<8x128xf32>
    %c0_1 = arith.constant 0 : index
    %c0_2 = arith.constant 0 : index
    %1 = vector.load %arg3[%c0_1, %c0_2] : memref<128x128xf32, #tpu.memory_space<vmem>>, vector<128x128xf32>
    %cst = arith.constant dense<0.000000e+00> : vector<8x128xf32>
    %2 = tpu.matmul %0, %1, %cst {dimension_numbers = #tpu.dot_dimension_numbers<[1], [0], [0], [1], [0, 0, 1, 1], [], []>} : vector<8x128xf32>, vector<128x128xf32>, vector<8x128xf32> -> vector<8x128xf32>
    %c0_3 = arith.constant 0 : index
    %c0_4 = arith.constant 0 : index
    %3 = vector.load %arg4[%c0_3, %c0_4] : memref<1x128xf32, #tpu.memory_space<vmem>>, vector<1x128xf32>
    %4 = vector.broadcast %3 : vector<1x128xf32> to vector<8x128xf32>
    %5 = arith.addf %2, %4 : vector<8x128xf32>
    %cst_5 = arith.constant 0.000000e+00 : f32
    %6 = vector.broadcast %cst_5 : f32 to vector<8x128xf32>
    %7 = arith.maximumf %5, %6 : vector<8x128xf32>
    %c0_6 = arith.constant 0 : index
    %c0_7 = arith.constant 0 : index
    %8 = vector.load %arg5[%c0_6, %c0_7] : memref<128x128xf32, #tpu.memory_space<vmem>>, vector<128x128xf32>
    %cst_8 = arith.constant dense<0.000000e+00> : vector<8x128xf32>
    %9 = tpu.matmul %7, %8, %cst_8 {dimension_numbers = #tpu.dot_dimension_numbers<[1], [0], [0], [1], [0, 0, 1, 1], [], []>} : vector<8x128xf32>, vector<128x128xf32>, vector<8x128xf32> -> vector<8x128xf32>
    %c0_9 = arith.constant 0 : index
    %c0_10 = arith.constant 0 : index
    %10 = vector.load %arg6[%c0_9, %c0_10] : memref<1x128xf32, #tpu.memory_space<vmem>>, vector<1x128xf32>
    %11 = vector.broadcast %10 : vector<1x128xf32> to vector<8x128xf32>
    %12 = arith.addf %9, %11 : vector<8x128xf32>
    %cst_11 = arith.constant 0.000000e+00 : f32
    %13 = vector.broadcast %cst_11 : f32 to vector<8x128xf32>
    %14 = arith.maximumf %12, %13 : vector<8x128xf32>
    %c0_12 = arith.constant 0 : index
    %c0_13 = arith.constant 0 : index
    %15 = vector.load %arg7[%c0_12, %c0_13] : memref<128x128xf32, #tpu.memory_space<vmem>>, vector<128x128xf32>
    %cst_14 = arith.constant dense<0.000000e+00> : vector<8x128xf32>
    %16 = tpu.matmul %14, %15, %cst_14 {dimension_numbers = #tpu.dot_dimension_numbers<[1], [0], [0], [1], [0, 0, 1, 1], [], []>} : vector<8x128xf32>, vector<128x128xf32>, vector<8x128xf32> -> vector<8x128xf32>
    %c0_15 = arith.constant 0 : index
    %c0_16 = arith.constant 0 : index
    %17 = vector.load %arg8[%c0_15, %c0_16] : memref<1x128xf32, #tpu.memory_space<vmem>>, vector<1x128xf32>
    %18 = vector.broadcast %17 : vector<1x128xf32> to vector<8x128xf32>
    %19 = arith.addf %16, %18 : vector<8x128xf32>
    %cst_17 = arith.constant 0.000000e+00 : f32
    %20 = vector.broadcast %cst_17 : f32 to vector<8x128xf32>
    %21 = arith.maximumf %19, %20 : vector<8x128xf32>
    %c0_18 = arith.constant 0 : index
    %c0_19 = arith.constant 0 : index
    %22 = vector.load %arg9[%c0_18, %c0_19] : memref<128x128xf32, #tpu.memory_space<vmem>>, vector<128x128xf32>
    %cst_20 = arith.constant dense<0.000000e+00> : vector<8x128xf32>
    %23 = tpu.matmul %21, %22, %cst_20 {dimension_numbers = #tpu.dot_dimension_numbers<[1], [0], [0], [1], [0, 0, 1, 1], [], []>} : vector<8x128xf32>, vector<128x128xf32>, vector<8x128xf32> -> vector<8x128xf32>
    %c0_21 = arith.constant 0 : index
    %c0_22 = arith.constant 0 : index
    %24 = vector.load %arg10[%c0_21, %c0_22] : memref<1x128xf32, #tpu.memory_space<vmem>>, vector<1x128xf32>
    %25 = vector.broadcast %24 : vector<1x128xf32> to vector<8x128xf32>
    %26 = arith.addf %23, %25 : vector<8x128xf32>
    %cst_23 = arith.constant 0.000000e+00 : f32
    %27 = vector.broadcast %cst_23 : f32 to vector<8x128xf32>
    %28 = arith.maximumf %26, %27 : vector<8x128xf32>
    %c0_24 = arith.constant 0 : index
    %c0_25 = arith.constant 0 : index
    %29 = vector.load %arg11[%c0_24, %c0_25] : memref<128x128xf32, #tpu.memory_space<vmem>>, vector<128x128xf32>
    %cst_26 = arith.constant dense<0.000000e+00> : vector<8x128xf32>
    %30 = tpu.matmul %28, %29, %cst_26 {dimension_numbers = #tpu.dot_dimension_numbers<[1], [0], [0], [1], [0, 0, 1, 1], [], []>} : vector<8x128xf32>, vector<128x128xf32>, vector<8x128xf32> -> vector<8x128xf32>
    %c0_27 = arith.constant 0 : index
    %c0_28 = arith.constant 0 : index
    %31 = vector.load %arg12[%c0_27, %c0_28] : memref<1x128xf32, #tpu.memory_space<vmem>>, vector<1x128xf32>
    %32 = vector.broadcast %31 : vector<1x128xf32> to vector<8x128xf32>
    %33 = arith.addf %30, %32 : vector<8x128xf32>
    %c0_29 = arith.constant 0 : index
    %c0_30 = arith.constant 0 : index
    %34 = vector.load %arg13[%c0_29, %c0_30] : memref<128x128xf32, #tpu.memory_space<vmem>>, vector<128x128xf32>
    %cst_31 = arith.constant dense<0.000000e+00> : vector<8x128xf32>
    %35 = tpu.matmul %33, %34, %cst_31 {dimension_numbers = #tpu.dot_dimension_numbers<[1], [0], [0], [1], [0, 0, 1, 1], [], []>} : vector<8x128xf32>, vector<128x128xf32>, vector<8x128xf32> -> vector<8x128xf32>
    %c0_32 = arith.constant 0 : index
    %c0_33 = arith.constant 0 : index
    %36 = vector.load %arg14[%c0_32, %c0_33] : memref<1x128xf32, #tpu.memory_space<vmem>>, vector<1x128xf32>
    %37 = vector.broadcast %36 : vector<1x128xf32> to vector<8x128xf32>
    %38 = arith.addf %35, %37 : vector<8x128xf32>
    %c0_34 = arith.constant 0 : index
    %c0_35 = arith.constant 0 : index
    %39 = vector.load %arg2[%c0_34, %c0_35] : memref<8x128xf32, #tpu.memory_space<vmem>>, vector<8x128xf32>
    %40 = arith.mulf %38, %39 : vector<8x128xf32>
    %c0_36 = arith.constant 0 : index
    %c0_37 = arith.constant 0 : index
    %41 = vector.load %arg15[%c0_36, %c0_37] : memref<8x128xf32, #tpu.memory_space<vmem>>, vector<8x128xf32>
    tpu.vector_store %arg15[%c0_36, %c0_37], %40 {strides = array<i32>} : memref<8x128xf32, #tpu.memory_space<vmem>>, vector<8x128xf32>,
    return
  }
  func.func @transform_0(%arg0: i32) -> (i32, i32) {
    %c0_i32 = arith.constant 0 : i32
    %c0_i32_0 = arith.constant 0 : i32
    return %arg0, %c0_i32 : i32, i32
  }
  func.func @transform_1(%arg0: i32) -> (i32, i32) {
    %c0_i32 = arith.constant 0 : i32
    %c0_i32_0 = arith.constant 0 : i32
    return %arg0, %c0_i32 : i32, i32
  }
  func.func @transform_2(%arg0: i32) -> (i32, i32) {
    %c0_i32 = arith.constant 0 : i32
    %c0_i32_0 = arith.constant 0 : i32
    %c0_i32_1 = arith.constant 0 : i32
    return %c0_i32, %c0_i32_0 : i32, i32
  }
  func.func @transform_3(%arg0: i32) -> (i32, i32) {
    %c0_i32 = arith.constant 0 : i32
    %c0_i32_0 = arith.constant 0 : i32
    %c0_i32_1 = arith.constant 0 : i32
    return %c0_i32, %c0_i32_0 : i32, i32
  }
  func.func @transform_4(%arg0: i32) -> (i32, i32) {
    %c0_i32 = arith.constant 0 : i32
    %c0_i32_0 = arith.constant 0 : i32
    %c0_i32_1 = arith.constant 0 : i32
    return %c0_i32, %c0_i32_0 : i32, i32
  }
  func.func @transform_5(%arg0: i32) -> (i32, i32) {
    %c0_i32 = arith.constant 0 : i32
    %c0_i32_0 = arith.constant 0 : i32
    %c0_i32_1 = arith.constant 0 : i32
    return %c0_i32, %c0_i32_0 : i32, i32
  }
  func.func @transform_6(%arg0: i32) -> (i32, i32) {
    %c0_i32 = arith.constant 0 : i32
    %c0_i32_0 = arith.constant 0 : i32
    %c0_i32_1 = arith.constant 0 : i32
    return %c0_i32, %c0_i32_0 : i32, i32
  }
  func.func @transform_7(%arg0: i32) -> (i32, i32) {
    %c0_i32 = arith.constant 0 : i32
    %c0_i32_0 = arith.constant 0 : i32
    %c0_i32_1 = arith.constant 0 : i32
    return %c0_i32, %c0_i32_0 : i32, i32
  }
  func.func @transform_8(%arg0: i32) -> (i32, i32) {
    %c0_i32 = arith.constant 0 : i32
    %c0_i32_0 = arith.constant 0 : i32
    %c0_i32_1 = arith.constant 0 : i32
    return %c0_i32, %c0_i32_0 : i32, i32
  }
  func.func @transform_9(%arg0: i32) -> (i32, i32) {
    %c0_i32 = arith.constant 0 : i32
    %c0_i32_0 = arith.constant 0 : i32
    %c0_i32_1 = arith.constant 0 : i32
    return %c0_i32, %c0_i32_0 : i32, i32
  }
  func.func @transform_10(%arg0: i32) -> (i32, i32) {
    %c0_i32 = arith.constant 0 : i32
    %c0_i32_0 = arith.constant 0 : i32
    %c0_i32_1 = arith.constant 0 : i32
    return %c0_i32, %c0_i32_0 : i32, i32
  }
  func.func @transform_11(%arg0: i32) -> (i32, i32) {
    %c0_i32 = arith.constant 0 : i32
    %c0_i32_0 = arith.constant 0 : i32
    %c0_i32_1 = arith.constant 0 : i32
    return %c0_i32, %c0_i32_0 : i32, i32
  }
  func.func @transform_12(%arg0: i32) -> (i32, i32) {
    %c0_i32 = arith.constant 0 : i32
    %c0_i32_0 = arith.constant 0 : i32
    %c0_i32_1 = arith.constant 0 : i32
    return %c0_i32, %c0_i32_0 : i32, i32
  }
  func.func @transform_13(%arg0: i32) -> (i32, i32) {
    %c0_i32 = arith.constant 0 : i32
    %c0_i32_0 = arith.constant 0 : i32
    %c0_i32_1 = arith.constant 0 : i32
    return %c0_i32, %c0_i32_0 : i32, i32
  }
  func.func @transform_14(%arg0: i32) -> (i32, i32) {
    %c0_i32 = arith.constant 0 : i32
    %c0_i32_0 = arith.constant 0 : i32
    return %arg0, %c0_i32 : i32, i32
  }
}

</mosaic_0001>

<llo_original>
// kernel: tpu_custom_call.1
$region0: #{tpu_custom_call.1}
  #allocation0 [shape = 'u32[]', space=smem, size = 0x4, offset = 0x4, fixed_abs, tag = 'smem constant byte address 0x4 - core index']
  #allocation1 [shape = 'u32[144,128]{1,0:T(1,128)}', space=vmem, size = 0x12000, scoped, tag = 'internal scratch']
  %s0 = inlined_call_operand.hbm [shape: f32[8,128], index: 0, kind: input, shape index: {}]
  %s1 = inlined_call_operand.hbm [shape: f32[8,128], index: 1, kind: input, shape index: {}]
  %s2 = inlined_call_operand.hbm [shape: f32[128,128], index: 2, kind: input, shape index: {}]
  %s3 = inlined_call_operand.vmem [shape: f32[1,128], index: 3, kind: input, shape index: {}]
  %s4 = inlined_call_operand.hbm [shape: f32[128,128], index: 4, kind: input, shape index: {}]
  %s5 = inlined_call_operand.vmem [shape: f32[1,128], index: 5, kind: input, shape index: {}]
  %s6 = inlined_call_operand.hbm [shape: f32[128,128], index: 6, kind: input, shape index: {}]
  %s7 = inlined_call_operand.vmem [shape: f32[1,128], index: 7, kind: input, shape index: {}]
  %s8 = inlined_call_operand.hbm [shape: f32[128,128], index: 8, kind: input, shape index: {}]
  %s9 = inlined_call_operand.vmem [shape: f32[1,128], index: 9, kind: input, shape index: {}]
  %s10 = inlined_call_operand.hbm [shape: f32[128,128], index: 10, kind: input, shape index: {}]
  %s11 = inlined_call_operand.vmem [shape: f32[1,128], index: 11, kind: input, shape index: {}]
  %s12 = inlined_call_operand.hbm [shape: f32[128,128], index: 12, kind: input, shape index: {}]
  %s13 = inlined_call_operand.vmem [shape: f32[1,128], index: 13, kind: input, shape index: {}]
  %s14 = inlined_call_operand.hbm [shape: f32[8,128], index: 14, kind: output, shape index: {}]
  %s15 = sld [smem:[#allocation0]]
  $region98: #{tpu_custom_call.1} parent=0
    _
  %s17 = ssub.s32 1, %s15
  %s18 = scalar_select 0, %s17, %s15
  $region1: #{tpu_custom_call.1} parent=0
    #allocation2 [shape = 'u8[4096]{0}', space=vmem, size = 0x1000, scoped, tag = 'input window, operand 0, single buffered']
    #allocation3 [shape = 's32[1]{0}', space=sflag, size = 0x4, scoped, tag = 'scoped memory for tpu_custom_call.1']
    #allocation4 [shape = 's32[1]{0}', space=sflag, size = 0x4, scoped, tag = 'scoped memory for tpu_custom_call.1']
    #allocation5 [shape = 'u8[4096]{0}', space=vmem, size = 0x1000, scoped, tag = 'input window, operand 1, single buffered']
    #allocation6 [shape = 's32[1]{0}', space=sflag, size = 0x4, scoped, tag = 'scoped memory for tpu_custom_call.1']
    #allocation7 [shape = 'u8[65536]{0}', space=vmem, size = 0x10000, scoped, tag = 'input window, operand 2, single buffered']
    #allocation8 [shape = 'u8[65536]{0}', space=vmem, size = 0x10000, scoped, tag = 'input window, operand 4, single buffered']
    #allocation9 [shape = 's32[1]{0}', space=sflag, size = 0x4, scoped, tag = 'scoped memory for tpu_custom_call.1']
    #allocation10 [shape = 'u8[65536]{0}', space=vmem, size = 0x10000, scoped, tag = 'input window, operand 6, single buffered']
    #allocation11 [shape = 'u8[65536]{0}', space=vmem, size = 0x10000, scoped, tag = 'input window, operand 8, single buffered']
    #allocation12 [shape = 's32[1]{0}', space=sflag, size = 0x4, scoped, tag = 'scoped memory for tpu_custom_call.1']
    #allocation13 [shape = 'u8[65536]{0}', space=vmem, size = 0x10000, scoped, tag = 'input window, operand 10, single buffered']
    #allocation14 [shape = 'u8[65536]{0}', space=vmem, size = 0x10000, scoped, tag = 'input window, operand 12, single buffered']
    #allocation15 [shape = 's32[1]{0}', space=sflag, size = 0x4, scoped, tag = 'scoped memory for tpu_custom_call.1']
    #allocation16 [shape = 'u8[4096]{0}', space=vmem, size = 0x1000, scoped, tag = 'output window, operand 0, single buffered']
    %19 = vsyncpa [#allocation3], 0
    %20 = vsyncpa [#allocation6], 0
    %21 = vsyncpa [#allocation9], 0
    %22 = vsyncpa [#allocation12], 0
    %23 = vsyncpa [#allocation15], 0
    %24 = vsyncpa [#allocation4], 0
    // Predicated region
    $region2: #{tpu_custom_call.1} parent=1 // pred_check
      _
    $region3: #{tpu_custom_call.1} parent=1 // pred_check_branch
      %26 = sbr.rel (0) target = $region5
    $region4: #{tpu_custom_call.1} parent=1 // pred_region
      %s28 = ssub.s32 128, 128
      %29 = vsyncadd [#allocation3], %s28
      %s31 = sshll.u32 [#allocation2], 4
      %s32 = int_to_ptr.vmem [resolvable:$true] %s31
      %34 = dma.hbm_to_vmem [thread:$0]  %s0, 128, %s32, [#allocation3]
    $region5: #{tpu_custom_call.1} parent=1 // pred_fallthru
      _
    // Predicated region
    $region6: #{tpu_custom_call.1} parent=1 // pred_check
      _
    $region7: #{tpu_custom_call.1} parent=1 // pred_check_branch
      %36 = sbr.rel (0) target = $region9
    $region8: #{tpu_custom_call.1} parent=1 // pred_region
      %s38 = ssub.s32 128, 128
      %39 = vsyncadd [#allocation6], %s38
      %s41 = sshll.u32 [#allocation5], 4
      %s42 = int_to_ptr.vmem [resolvable:$true] %s41
      %44 = dma.hbm_to_vmem [thread:$0]  %s1, 128, %s42, [#allocation6]
    $region9: #{tpu_custom_call.1} parent=1 // pred_fallthru
      _
    // Predicated region
    $region10: #{tpu_custom_call.1} parent=1 // pred_check
      _
    $region11: #{tpu_custom_call.1} parent=1 // pred_check_branch
      %46 = sbr.rel (0) target = $region13
    $region12: #{tpu_custom_call.1} parent=1 // pred_region
      %s48 = ssub.s32 2048, 2048
      %49 = vsyncadd [#allocation6], %s48
      %s50 = sshll.u32 [#allocation7], 4
      %s51 = int_to_ptr.vmem [resolvable:$true] %s50
      %56 = dma.hbm_to_vmem [thread:$0]  %s2, 2048, %s51, [#allocation6], 128, 128, 8
    $region13: #{tpu_custom_call.1} parent=1 // pred_fallthru
      _
    // Predicated region
    $region14: #{tpu_custom_call.1} parent=1 // pred_check
      _
    $region15: #{tpu_custom_call.1} parent=1 // pred_check_branch
      %58 = sbr.rel (0) target = $region17
    $region16: #{tpu_custom_call.1} parent=1 // pred_region
      _
    $region17: #{tpu_custom_call.1} parent=1 // pred_fallthru
      _
    // Predicated region
    $region18: #{tpu_custom_call.1} parent=1 // pred_check
      _
    $region19: #{tpu_custom_call.1} parent=1 // pred_check_branch
      %60 = sbr.rel (0) target = $region21
    $region20: #{tpu_custom_call.1} parent=1 // pred_region
      %s62 = ssub.s32 2048, 2048
      %63 = vsyncadd [#allocation9], %s62
      %s64 = sshll.u32 [#allocation8], 4
      %s65 = int_to_ptr.vmem [resolvable:$true] %s64
      %70 = dma.hbm_to_vmem [thread:$0]  %s4, 2048, %s65, [#allocation9], 128, 128, 8
    $region21: #{tpu_custom_call.1} parent=1 // pred_fallthru
      _
    // Predicated region
    $region22: #{tpu_custom_call.1} parent=1 // pred_check
      _
    $region23: #{tpu_custom_call.1} parent=1 // pred_check_branch
      %72 = sbr.rel (0) target = $region25
    $region24: #{tpu_custom_call.1} parent=1 // pred_region
      _
    $region25: #{tpu_custom_call.1} parent=1 // pred_fallthru
      _
    // Predicated region
    $region26: #{tpu_custom_call.1} parent=1 // pred_check
      _
    $region27: #{tpu_custom_call.1} parent=1 // pred_check_branch
      %74 = sbr.rel (0) target = $region29
    $region28: #{tpu_custom_call.1} parent=1 // pred_region
      %s76 = ssub.s32 2048, 2048
      %77 = vsyncadd [#allocation9], %s76
      %s78 = sshll.u32 [#allocation10], 4
      %s79 = int_to_ptr.vmem [resolvable:$true] %s78
      %84 = dma.hbm_to_vmem [thread:$0]  %s6, 2048, %s79, [#allocation9], 128, 128, 8
    $region29: #{tpu_custom_call.1} parent=1 // pred_fallthru
      _
    // Predicated region
    $region30: #{tpu_custom_call.1} parent=1 // pred_check
      _
    $region31: #{tpu_custom_call.1} parent=1 // pred_check_branch
      %86 = sbr.rel (0) target = $region33
    $region32: #{tpu_custom_call.1} parent=1 // pred_region
      _
    $region33: #{tpu_custom_call.1} parent=1 // pred_fallthru
      _
    // Predicated region
    $region34: #{tpu_custom_call.1} parent=1 // pred_check
      _
    $region35: #{tpu_custom_call.1} parent=1 // pred_check_branch
      %88 = sbr.rel (0) target = $region37
    $region36: #{tpu_custom_call.1} parent=1 // pred_region
      %s90 = ssub.s32 2048, 2048
      %91 = vsyncadd [#allocation12], %s90
      %s92 = sshll.u32 [#allocation11], 4
      %s93 = int_to_ptr.vmem [resolvable:$true] %s92
      %98 = dma.hbm_to_vmem [thread:$0]  %s8, 2048, %s93, [#allocation12], 128, 128, 8
    $region37: #{tpu_custom_call.1} parent=1 // pred_fallthru
      _
    // Predicated region
    $region38: #{tpu_custom_call.1} parent=1 // pred_check
      _
    $region39: #{tpu_custom_call.1} parent=1 // pred_check_branch
      %100 = sbr.rel (0) target = $region41
    $region40: #{tpu_custom_call.1} parent=1 // pred_region
      _
    $region41: #{tpu_custom_call.1} parent=1 // pred_fallthru
      _
    // Predicated region
    $region42: #{tpu_custom_call.1} parent=1 // pred_check
      _
    $region43: #{tpu_custom_call.1} parent=1 // pred_check_branch
      %102 = sbr.rel (0) target = $region45
    $region44: #{tpu_custom_call.1} parent=1 // pred_region
      %s104 = ssub.s32 2048, 2048
      %105 = vsyncadd [#allocation12], %s104
      %s106 = sshll.u32 [#allocation13], 4
      %s107 = int_to_ptr.vmem [resolvable:$true] %s106
      %112 = dma.hbm_to_vmem [thread:$0]  %s10, 2048, %s107, [#allocation12], 128, 128, 8
    $region45: #{tpu_custom_call.1} parent=1 // pred_fallthru
      _
    // Predicated region
    $region46: #{tpu_custom_call.1} parent=1 // pred_check
      _
    $region47: #{tpu_custom_call.1} parent=1 // pred_check_branch
      %114 = sbr.rel (0) target = $region49
    $region48: #{tpu_custom_call.1} parent=1 // pred_region
      _
    $region49: #{tpu_custom_call.1} parent=1 // pred_fallthru
      _
    // Predicated region
    $region50: #{tpu_custom_call.1} parent=1 // pred_check
      _
    $region51: #{tpu_custom_call.1} parent=1 // pred_check_branch
      %116 = sbr.rel (0) target = $region53
    $region52: #{tpu_custom_call.1} parent=1 // pred_region
      %s118 = ssub.s32 2048, 2048
      %119 = vsyncadd [#allocation15], %s118
      %s120 = sshll.u32 [#allocation14], 4
      %s121 = int_to_ptr.vmem [resolvable:$true] %s120
      %126 = dma.hbm_to_vmem [thread:$0]  %s12, 2048, %s121, [#allocation15], 128, 128, 8
    $region53: #{tpu_custom_call.1} parent=1 // pred_fallthru
      _
    // Predicated region
    $region54: #{tpu_custom_call.1} parent=1 // pred_check
      _
    $region55: #{tpu_custom_call.1} parent=1 // pred_check_branch
      %128 = sbr.rel (0) target = $region57
    $region56: #{tpu_custom_call.1} parent=1 // pred_region
      _
    $region57: #{tpu_custom_call.1} parent=1 // pred_fallthru
      _
    // Predicated region
    $region58: #{tpu_custom_call.1} parent=1 // pred_check
      _
    $region59: #{tpu_custom_call.1} parent=1 // pred_check_branch
      %130 = sbr.rel (0) target = $region61
    $region60: #{tpu_custom_call.1} parent=1 // pred_region
      %131 = dma.done [#allocation3], 128
    $region61: #{tpu_custom_call.1} parent=1 // pred_fallthru
      _
    // Predicated region
    $region62: #{tpu_custom_call.1} parent=1 // pred_check
      _
    $region63: #{tpu_custom_call.1} parent=1 // pred_check_branch
      %133 = sbr.rel (0) target = $region65
    $region64: #{tpu_custom_call.1} parent=1 // pred_region
      %134 = dma.done [#allocation6], 128
    $region65: #{tpu_custom_call.1} parent=1 // pred_fallthru
      _
    // Predicated region
    $region66: #{tpu_custom_call.1} parent=1 // pred_check
      _
    $region67: #{tpu_custom_call.1} parent=1 // pred_check_branch
      %136 = sbr.rel (0) target = $region69
    $region68: #{tpu_custom_call.1} parent=1 // pred_region
      %137 = dma.done [#allocation6], 2048
    $region69: #{tpu_custom_call.1} parent=1 // pred_fallthru
      _
    // Predicated region
    $region70: #{tpu_custom_call.1} parent=1 // pred_check
      _
    $region71: #{tpu_custom_call.1} parent=1 // pred_check_branch
      %139 = sbr.rel (0) target = $region73
    $region72: #{tpu_custom_call.1} parent=1 // pred_region
      %140 = dma.done [#allocation9], 2048
    $region73: #{tpu_custom_call.1} parent=1 // pred_fallthru
      _
    // Predicated region
    $region74: #{tpu_custom_call.1} parent=1 // pred_check
      _
    $region75: #{tpu_custom_call.1} parent=1 // pred_check_branch
      %142 = sbr.rel (0) target = $region77
    $region76: #{tpu_custom_call.1} parent=1 // pred_region
      %143 = dma.done [#allocation9], 2048
    $region77: #{tpu_custom_call.1} parent=1 // pred_fallthru
      _
    // Predicated region
    $region78: #{tpu_custom_call.1} parent=1 // pred_check
      _
    $region79: #{tpu_custom_call.1} parent=1 // pred_check_branch
      %145 = sbr.rel (0) target = $region81
    $region80: #{tpu_custom_call.1} parent=1 // pred_region
      %146 = dma.done [#allocation12], 2048
    $region81: #{tpu_custom_call.1} parent=1 // pred_fallthru
      _
    // Predicated region
    $region82: #{tpu_custom_call.1} parent=1 // pred_check
      _
    $region83: #{tpu_custom_call.1} parent=1 // pred_check_branch
      %148 = sbr.rel (0) target = $region85
    $region84: #{tpu_custom_call.1} parent=1 // pred_region
      %149 = dma.done [#allocation12], 2048
    $region85: #{tpu_custom_call.1} parent=1 // pred_fallthru
      _
    // Predicated region
    $region86: #{tpu_custom_call.1} parent=1 // pred_check
      _
    $region87: #{tpu_custom_call.1} parent=1 // pred_check_branch
      %151 = sbr.rel (0) target = $region89
    $region88: #{tpu_custom_call.1} parent=1 // pred_region
      %152 = dma.done [#allocation15], 2048
    $region89: #{tpu_custom_call.1} parent=1 // pred_fallthru
      _
    %v153 = vld [vmem:[#allocation2] sm:$0xff]
    %v154 = vld [vmem:[#allocation7] sm:$0xff]
    %v155 = vld [vmem:[#allocation7 + $0x8] sm:$0xff]
    %v156 = vld [vmem:[#allocation7 + $0x10] sm:$0xff]
    %v157 = vld [vmem:[#allocation7 + $0x18] sm:$0xff]
    %v158 = vld [vmem:[#allocation7 + $0x20] sm:$0xff]
    %v159 = vld [vmem:[#allocation7 + $0x28] sm:$0xff]
    %v160 = vld [vmem:[#allocation7 + $0x30] sm:$0xff]
    %v161 = vld [vmem:[#allocation7 + $0x38] sm:$0xff]
    %v162 = vld [vmem:[#allocation7 + $0x40] sm:$0xff]
    %v163 = vld [vmem:[#allocation7 + $0x48] sm:$0xff]
    %v164 = vld [vmem:[#allocation7 + $0x50] sm:$0xff]
    %v165 = vld [vmem:[#allocation7 + $0x58] sm:$0xff]
    %v166 = vld [vmem:[#allocation7 + $0x60] sm:$0xff]
    %v167 = vld [vmem:[#allocation7 + $0x68] sm:$0xff]
    %v168 = vld [vmem:[#allocation7 + $0x70] sm:$0xff]
    %v169 = vld [vmem:[#allocation7 + $0x78] sm:$0xff]
    %v170 = vld [vmem:[%s3] sm:$0x1]
    %v172 = vlaneseq
    %v173 = vshrl.u32 %v172, 7
    %v174 = vsub.s32 0, %v173
    %v175 = vrot.slane %v170, %v174
    %177 = vmatprep.subr.mxu0 0.0
    %178 = vmatpush1.msra.mxu0 %v169
    %179 = vmatprep.subr.mxu0 0.0
    %180 = vmatpush1.msra.mxu0 %v168
    %181 = vmatprep.subr.mxu0 0.0
    %182 = vmatpush1.msra.mxu0 %v167
    %183 = vmatprep.subr.mxu0 0.0
    %184 = vmatpush1.msra.mxu0 %v166
    %185 = vmatprep.subr.mxu0 0.0
    %186 = vmatpush1.msra.mxu0 %v165
    %187 = vmatprep.subr.mxu0 0.0
    %188 = vmatpush1.msra.mxu0 %v164
    %189 = vmatprep.subr.mxu0 0.0
    %190 = vmatpush1.msra.mxu0 %v163
    %191 = vmatprep.subr.mxu0 0.0
    %192 = vmatpush1.msra.mxu0 %v162
    %193 = vmatprep.subr.mxu0 0.0
    %194 = vmatpush1.msra.mxu0 %v161
    %195 = vmatprep.subr.mxu0 0.0
    %196 = vmatpush1.msra.mxu0 %v160
    %197 = vmatprep.subr.mxu0 0.0
    %198 = vmatpush1.msra.mxu0 %v159
    %199 = vmatprep.subr.mxu0 0.0
    %200 = vmatpush1.msra.mxu0 %v158
    %201 = vmatprep.subr.mxu0 0.0
    %202 = vmatpush1.msra.mxu0 %v157
    %203 = vmatprep.subr.mxu0 0.0
    %204 = vmatpush1.msra.mxu0 %v156
    %205 = vmatprep.subr.mxu0 0.0
    %206 = vmatpush1.msra.mxu0 %v155
    %207 = vmatprep.subr.mxu0 0.0
    %208 = vmatpush1.msra.mxu0 %v154
    %209 = vmatprep.subr.mxu0 0.0
    %210 = vmatpush2.msra.mxu0 0.0
    %211 = vmatprep.subr.mxu0 0.0
    %212 = vmatpush2.msra.mxu0 0.0
    %213 = vmatprep.subr.mxu0 0.0
    %214 = vmatpush2.msra.mxu0 0.0
    %215 = vmatprep.subr.mxu0 0.0
    %216 = vmatpush2.msra.mxu0 0.0
    %217 = vmatprep.subr.mxu0 0.0
    %218 = vmatpush2.msra.mxu0 0.0
    %219 = vmatprep.subr.mxu0 0.0
    %220 = vmatpush2.msra.mxu0 0.0
    %221 = vmatprep.subr.mxu0 0.0
    %222 = vmatpush2.msra.mxu0 0.0
    %223 = vmatprep.subr.mxu0 0.0
    %224 = vmatpush2.msra.mxu0 0.0
    %225 = vmatprep.subr.mxu0 0.0
    %226 = vmatpush2.msra.mxu0 0.0
    %227 = vmatprep.subr.mxu0 0.0
    %228 = vmatpush2.msra.mxu0 0.0
    %229 = vmatprep.subr.mxu0 0.0
    %230 = vmatpush2.msra.mxu0 0.0
    %231 = vmatprep.subr.mxu0 0.0
    %232 = vmatpush2.msra.mxu0 0.0
    %233 = vmatprep.subr.mxu0 0.0
    %234 = vmatpush2.msra.mxu0 0.0
    %235 = vmatprep.subr.mxu0 0.0
    %236 = vmatpush2.msra.mxu0 0.0
    %237 = vmatprep.subr.mxu0 0.0
    %238 = vmatpush2.msra.mxu0 0.0
    %239 = vmatprep.subr.mxu0 0.0
    %240 = vmatpush2.msra.mxu0 0.0
    %241 = vmatprep.mubr.f32.mxu0 0.0
    %242 = vmatmul.mubr.f32.gmra.mxu0 %v153
    %v243 = vpop.f32.mrf.mxu0
    %v244 = vadd.f32 %v175, %v243
    %v245 = vpop.f32.mrf.mxu0
    %246 = vdwg.mxu0
    %v247 = vmax.f32 %v244, 0.0
    %v248 = vld [vmem:[#allocation8] sm:$0xff]
    %v249 = vld [vmem:[#allocation8 + $0x8] sm:$0xff]
    %v250 = vld [vmem:[#allocation8 + $0x10] sm:$0xff]
    %v251 = vld [vmem:[#allocation8 + $0x18] sm:$0xff]
    %v252 = vld [vmem:[#allocation8 + $0x20] sm:$0xff]
    %v253 = vld [vmem:[#allocation8 + $0x28] sm:$0xff]
    %v254 = vld [vmem:[#allocation8 + $0x30] sm:$0xff]
    %v255 = vld [vmem:[#allocation8 + $0x38] sm:$0xff]
    %v256 = vld [vmem:[#allocation8 + $0x40] sm:$0xff]
    %v257 = vld [vmem:[#allocation8 + $0x48] sm:$0xff]
    %v258 = vld [vmem:[#allocation8 + $0x50] sm:$0xff]
    %v259 = vld [vmem:[#allocation8 + $0x58] sm:$0xff]
    %v260 = vld [vmem:[#allocation8 + $0x60] sm:$0xff]
    %v261 = vld [vmem:[#allocation8 + $0x68] sm:$0xff]
    %v262 = vld [vmem:[#allocation8 + $0x70] sm:$0xff]
    %v263 = vld [vmem:[#allocation8 + $0x78] sm:$0xff]
    %v264 = vld [vmem:[%s5] sm:$0x1]
    %v266 = vlaneseq
    %v267 = vshrl.u32 %v266, 7
    %v268 = vsub.s32 0, %v267
    %v269 = vrot.slane %v264, %v268
    %271 = vmatprep.subr.mxu0 0.0
    %272 = vmatpush1.msra.mxu0 %v263
    %273 = vmatprep.subr.mxu0 0.0
    %274 = vmatpush1.msra.mxu0 %v262
    %275 = vmatprep.subr.mxu0 0.0
    %276 = vmatpush1.msra.mxu0 %v261
    %277 = vmatprep.subr.mxu0 0.0
    %278 = vmatpush1.msra.mxu0 %v260
    %279 = vmatprep.subr.mxu0 0.0
    %280 = vmatpush1.msra.mxu0 %v259
    %281 = vmatprep.subr.mxu0 0.0
    %282 = vmatpush1.msra.mxu0 %v258
    %283 = vmatprep.subr.mxu0 0.0
    %284 = vmatpush1.msra.mxu0 %v257
    %285 = vmatprep.subr.mxu0 0.0
    %286 = vmatpush1.msra.mxu0 %v256
    %287 = vmatprep.subr.mxu0 0.0
    %288 = vmatpush1.msra.mxu0 %v255
    %289 = vmatprep.subr.mxu0 0.0
    %290 = vmatpush1.msra.mxu0 %v254
    %291 = vmatprep.subr.mxu0 0.0
    %292 = vmatpush1.msra.mxu0 %v253
    %293 = vmatprep.subr.mxu0 0.0
    %294 = vmatpush1.msra.mxu0 %v252
    %295 = vmatprep.subr.mxu0 0.0
    %296 = vmatpush1.msra.mxu0 %v251
    %297 = vmatprep.subr.mxu0 0.0
    %298 = vmatpush1.msra.mxu0 %v250
    %299 = vmatprep.subr.mxu0 0.0
    %300 = vmatpush1.msra.mxu0 %v249
    %301 = vmatprep.subr.mxu0 0.0
    %302 = vmatpush1.msra.mxu0 %v248
    %303 = vmatprep.subr.mxu0 0.0
    %304 = vmatpush2.msra.mxu0 0.0
    %305 = vmatprep.subr.mxu0 0.0
    %306 = vmatpush2.msra.mxu0 0.0
    %307 = vmatprep.subr.mxu0 0.0
    %308 = vmatpush2.msra.mxu0 0.0
    %309 = vmatprep.subr.mxu0 0.0
    %310 = vmatpush2.msra.mxu0 0.0
    %311 = vmatprep.subr.mxu0 0.0
    %312 = vmatpush2.msra.mxu0 0.0
    %313 = vmatprep.subr.mxu0 0.0
    %314 = vmatpush2.msra.mxu0 0.0
    %315 = vmatprep.subr.mxu0 0.0
    %316 = vmatpush2.msra.mxu0 0.0
    %317 = vmatprep.subr.mxu0 0.0
    %318 = vmatpush2.msra.mxu0 0.0
    %319 = vmatprep.subr.mxu0 0.0
    %320 = vmatpush2.msra.mxu0 0.0
    %321 = vmatprep.subr.mxu0 0.0
    %322 = vmatpush2.msra.mxu0 0.0
    %323 = vmatprep.subr.mxu0 0.0
    %324 = vmatpush2.msra.mxu0 0.0
    %325 = vmatprep.subr.mxu0 0.0
    %326 = vmatpush2.msra.mxu0 0.0
    %327 = vmatprep.subr.mxu0 0.0
    %328 = vmatpush2.msra.mxu0 0.0
    %329 = vmatprep.subr.mxu0 0.0
    %330 = vmatpush2.msra.mxu0 0.0
    %331 = vmatprep.subr.mxu0 0.0
    %332 = vmatpush2.msra.mxu0 0.0
    %333 = vmatprep.subr.mxu0 0.0
    %334 = vmatpush2.msra.mxu0 0.0
    %335 = vmatprep.mubr.f32.mxu0 0.0
    %336 = vmatmul.mubr.f32.gmra.mxu0 %v247
    %v337 = vpop.f32.mrf.mxu0
    %v338 = vadd.f32 %v269, %v337
    %v339 = vpop.f32.mrf.mxu0
    %340 = vdwg.mxu0
    %v341 = vmax.f32 %v338, 0.0
    %v342 = vld [vmem:[#allocation10] sm:$0xff]
    %v343 = vld [vmem:[#allocation10 + $0x8] sm:$0xff]
    %v344 = vld [vmem:[#allocation10 + $0x10] sm:$0xff]
    %v345 = vld [vmem:[#allocation10 + $0x18] sm:$0xff]
    %v346 = vld [vmem:[#allocation10 + $0x20] sm:$0xff]
    %v347 = vld [vmem:[#allocation10 + $0x28] sm:$0xff]
    %v348 = vld [vmem:[#allocation10 + $0x30] sm:$0xff]
    %v349 = vld [vmem:[#allocation10 + $0x38] sm:$0xff]
    %v350 = vld [vmem:[#allocation10 + $0x40] sm:$0xff]
    %v351 = vld [vmem:[#allocation10 + $0x48] sm:$0xff]
    %v352 = vld [vmem:[#allocation10 + $0x50] sm:$0xff]
    %v353 = vld [vmem:[#allocation10 + $0x58] sm:$0xff]
    %v354 = vld [vmem:[#allocation10 + $0x60] sm:$0xff]
    %v355 = vld [vmem:[#allocation10 + $0x68] sm:$0xff]
    %v356 = vld [vmem:[#allocation10 + $0x70] sm:$0xff]
    %v357 = vld [vmem:[#allocation10 + $0x78] sm:$0xff]
    %v358 = vld [vmem:[%s7] sm:$0x1]
    %v360 = vlaneseq
    %v361 = vshrl.u32 %v360, 7
    %v362 = vsub.s32 0, %v361
    %v363 = vrot.slane %v358, %v362
    %365 = vmatprep.subr.mxu0 0.0
    %366 = vmatpush1.msra.mxu0 %v357
    %367 = vmatprep.subr.mxu0 0.0
    %368 = vmatpush1.msra.mxu0 %v356
    %369 = vmatprep.subr.mxu0 0.0
    %370 = vmatpush1.msra.mxu0 %v355
    %371 = vmatprep.subr.mxu0 0.0
    %372 = vmatpush1.msra.mxu0 %v354
    %373 = vmatprep.subr.mxu0 0.0
    %374 = vmatpush1.msra.mxu0 %v353
    %375 = vmatprep.subr.mxu0 0.0
    %376 = vmatpush1.msra.mxu0 %v352
    %377 = vmatprep.subr.mxu0 0.0
    %378 = vmatpush1.msra.mxu0 %v351
    %379 = vmatprep.subr.mxu0 0.0
    %380 = vmatpush1.msra.mxu0 %v350
    %381 = vmatprep.subr.mxu0 0.0
    %382 = vmatpush1.msra.mxu0 %v349
    %383 = vmatprep.subr.mxu0 0.0
    %384 = vmatpush1.msra.mxu0 %v348
    %385 = vmatprep.subr.mxu0 0.0
    %386 = vmatpush1.msra.mxu0 %v347
    %387 = vmatprep.subr.mxu0 0.0
    %388 = vmatpush1.msra.mxu0 %v346
    %389 = vmatprep.subr.mxu0 0.0
    %390 = vmatpush1.msra.mxu0 %v345
    %391 = vmatprep.subr.mxu0 0.0
    %392 = vmatpush1.msra.mxu0 %v344
    %393 = vmatprep.subr.mxu0 0.0
    %394 = vmatpush1.msra.mxu0 %v343
    %395 = vmatprep.subr.mxu0 0.0
    %396 = vmatpush1.msra.mxu0 %v342
    %397 = vmatprep.subr.mxu0 0.0
    %398 = vmatpush2.msra.mxu0 0.0
    %399 = vmatprep.subr.mxu0 0.0
    %400 = vmatpush2.msra.mxu0 0.0
    %401 = vmatprep.subr.mxu0 0.0
    %402 = vmatpush2.msra.mxu0 0.0
    %403 = vmatprep.subr.mxu0 0.0
    %404 = vmatpush2.msra.mxu0 0.0
    %405 = vmatprep.subr.mxu0 0.0
    %406 = vmatpush2.msra.mxu0 0.0
    %407 = vmatprep.subr.mxu0 0.0
    %408 = vmatpush2.msra.mxu0 0.0
    %409 = vmatprep.subr.mxu0 0.0
    %410 = vmatpush2.msra.mxu0 0.0
    %411 = vmatprep.subr.mxu0 0.0
    %412 = vmatpush2.msra.mxu0 0.0
    %413 = vmatprep.subr.mxu0 0.0
    %414 = vmatpush2.msra.mxu0 0.0
    %415 = vmatprep.subr.mxu0 0.0
    %416 = vmatpush2.msra.mxu0 0.0
    %417 = vmatprep.subr.mxu0 0.0
    %418 = vmatpush2.msra.mxu0 0.0
    %419 = vmatprep.subr.mxu0 0.0
    %420 = vmatpush2.msra.mxu0 0.0
    %421 = vmatprep.subr.mxu0 0.0
    %422 = vmatpush2.msra.mxu0 0.0
    %423 = vmatprep.subr.mxu0 0.0
    %424 = vmatpush2.msra.mxu0 0.0
    %425 = vmatprep.subr.mxu0 0.0
    %426 = vmatpush2.msra.mxu0 0.0
    %427 = vmatprep.subr.mxu0 0.0
    %428 = vmatpush2.msra.mxu0 0.0
    %429 = vmatprep.mubr.f32.mxu0 0.0
    %430 = vmatmul.mubr.f32.gmra.mxu0 %v341
    %v431 = vpop.f32.mrf.mxu0
    %v432 = vadd.f32 %v363, %v431
    %v433 = vpop.f32.mrf.mxu0
    %434 = vdwg.mxu0
    %v435 = vmax.f32 %v432, 0.0
    %v436 = vld [vmem:[#allocation11] sm:$0xff]
    %v437 = vld [vmem:[#allocation11 + $0x8] sm:$0xff]
    %v438 = vld [vmem:[#allocation11 + $0x10] sm:$0xff]
    %v439 = vld [vmem:[#allocation11 + $0x18] sm:$0xff]
    %v440 = vld [vmem:[#allocation11 + $0x20] sm:$0xff]
    %v441 = vld [vmem:[#allocation11 + $0x28] sm:$0xff]
    %v442 = vld [vmem:[#allocation11 + $0x30] sm:$0xff]
    %v443 = vld [vmem:[#allocation11 + $0x38] sm:$0xff]
    %v444 = vld [vmem:[#allocation11 + $0x40] sm:$0xff]
    %v445 = vld [vmem:[#allocation11 + $0x48] sm:$0xff]
    %v446 = vld [vmem:[#allocation11 + $0x50] sm:$0xff]
    %v447 = vld [vmem:[#allocation11 + $0x58] sm:$0xff]
    %v448 = vld [vmem:[#allocation11 + $0x60] sm:$0xff]
    %v449 = vld [vmem:[#allocation11 + $0x68] sm:$0xff]
    %v450 = vld [vmem:[#allocation11 + $0x70] sm:$0xff]
    %v451 = vld [vmem:[#allocation11 + $0x78] sm:$0xff]
    %v452 = vld [vmem:[%s9] sm:$0x1]
    %v454 = vlaneseq
    %v455 = vshrl.u32 %v454, 7
    %v456 = vsub.s32 0, %v455
    %v457 = vrot.slane %v452, %v456
    %459 = vmatprep.subr.mxu0 0.0
    %460 = vmatpush1.msra.mxu0 %v451
    %461 = vmatprep.subr.mxu0 0.0
    %462 = vmatpush1.msra.mxu0 %v450
    %463 = vmatprep.subr.mxu0 0.0
    %464 = vmatpush1.msra.mxu0 %v449
    %465 = vmatprep.subr.mxu0 0.0
    %466 = vmatpush1.msra.mxu0 %v448
    %467 = vmatprep.subr.mxu0 0.0
    %468 = vmatpush1.msra.mxu0 %v447
    %469 = vmatprep.subr.mxu0 0.0
    %470 = vmatpush1.msra.mxu0 %v446
    %471 = vmatprep.subr.mxu0 0.0
    %472 = vmatpush1.msra.mxu0 %v445
    %473 = vmatprep.subr.mxu0 0.0
    %474 = vmatpush1.msra.mxu0 %v444
    %475 = vmatprep.subr.mxu0 0.0
    %476 = vmatpush1.msra.mxu0 %v443
    %477 = vmatprep.subr.mxu0 0.0
    %478 = vmatpush1.msra.mxu0 %v442
    %479 = vmatprep.subr.mxu0 0.0
    %480 = vmatpush1.msra.mxu0 %v441
    %481 = vmatprep.subr.mxu0 0.0
    %482 = vmatpush1.msra.mxu0 %v440
    %483 = vmatprep.subr.mxu0 0.0
    %484 = vmatpush1.msra.mxu0 %v439
    %485 = vmatprep.subr.mxu0 0.0
    %486 = vmatpush1.msra.mxu0 %v438
    %487 = vmatprep.subr.mxu0 0.0
    %488 = vmatpush1.msra.mxu0 %v437
    %489 = vmatprep.subr.mxu0 0.0
    %490 = vmatpush1.msra.mxu0 %v436
    %491 = vmatprep.subr.mxu0 0.0
    %492 = vmatpush2.msra.mxu0 0.0
    %493 = vmatprep.subr.mxu0 0.0
    %494 = vmatpush2.msra.mxu0 0.0
    %495 = vmatprep.subr.mxu0 0.0
    %496 = vmatpush2.msra.mxu0 0.0
    %497 = vmatprep.subr.mxu0 0.0
    %498 = vmatpush2.msra.mxu0 0.0
    %499 = vmatprep.subr.mxu0 0.0
    %500 = vmatpush2.msra.mxu0 0.0
    %501 = vmatprep.subr.mxu0 0.0
    %502 = vmatpush2.msra.mxu0 0.0
    %503 = vmatprep.subr.mxu0 0.0
    %504 = vmatpush2.msra.mxu0 0.0
    %505 = vmatprep.subr.mxu0 0.0
    %506 = vmatpush2.msra.mxu0 0.0
    %507 = vmatprep.subr.mxu0 0.0
    %508 = vmatpush2.msra.mxu0 0.0
    %509 = vmatprep.subr.mxu0 0.0
    %510 = vmatpush2.msra.mxu0 0.0
    %511 = vmatprep.subr.mxu0 0.0
    %512 = vmatpush2.msra.mxu0 0.0
    %513 = vmatprep.subr.mxu0 0.0
    %514 = vmatpush2.msra.mxu0 0.0
    %515 = vmatprep.subr.mxu0 0.0
    %516 = vmatpush2.msra.mxu0 0.0
    %517 = vmatprep.subr.mxu0 0.0
    %518 = vmatpush2.msra.mxu0 0.0
    %519 = vmatprep.subr.mxu0 0.0
    %520 = vmatpush2.msra.mxu0 0.0
    %521 = vmatprep.subr.mxu0 0.0
    %522 = vmatpush2.msra.mxu0 0.0
    %523 = vmatprep.mubr.f32.mxu0 0.0
    %524 = vmatmul.mubr.f32.gmra.mxu0 %v435
    %v525 = vpop.f32.mrf.mxu0
    %v526 = vadd.f32 %v457, %v525
    %v527 = vpop.f32.mrf.mxu0
    %528 = vdwg.mxu0
    %v529 = vmax.f32 %v526, 0.0
    %v530 = vld [vmem:[#allocation13] sm:$0xff]
    %v531 = vld [vmem:[#allocation13 + $0x8] sm:$0xff]
    %v532 = vld [vmem:[#allocation13 + $0x10] sm:$0xff]
    %v533 = vld [vmem:[#allocation13 + $0x18] sm:$0xff]
    %v534 = vld [vmem:[#allocation13 + $0x20] sm:$0xff]
    %v535 = vld [vmem:[#allocation13 + $0x28] sm:$0xff]
    %v536 = vld [vmem:[#allocation13 + $0x30] sm:$0xff]
    %v537 = vld [vmem:[#allocation13 + $0x38] sm:$0xff]
    %v538 = vld [vmem:[#allocation13 + $0x40] sm:$0xff]
    %v539 = vld [vmem:[#allocation13 + $0x48] sm:$0xff]
    %v540 = vld [vmem:[#allocation13 + $0x50] sm:$0xff]
    %v541 = vld [vmem:[#allocation13 + $0x58] sm:$0xff]
    %v542 = vld [vmem:[#allocation13 + $0x60] sm:$0xff]
    %v543 = vld [vmem:[#allocation13 + $0x68] sm:$0xff]
    %v544 = vld [vmem:[#allocation13 + $0x70] sm:$0xff]
    %v545 = vld [vmem:[#allocation13 + $0x78] sm:$0xff]
    %v546 = vld [vmem:[%s11] sm:$0x1]
    %v548 = vlaneseq
    %v549 = vshrl.u32 %v548, 7
    %v550 = vsub.s32 0, %v549
    %v551 = vrot.slane %v546, %v550
    %553 = vmatprep.subr.mxu0 0.0
    %554 = vmatpush1.msra.mxu0 %v545
    %555 = vmatprep.subr.mxu0 0.0
    %556 = vmatpush1.msra.mxu0 %v544
    %557 = vmatprep.subr.mxu0 0.0
    %558 = vmatpush1.msra.mxu0 %v543
    %559 = vmatprep.subr.mxu0 0.0
    %560 = vmatpush1.msra.mxu0 %v542
    %561 = vmatprep.subr.mxu0 0.0
    %562 = vmatpush1.msra.mxu0 %v541
    %563 = vmatprep.subr.mxu0 0.0
    %564 = vmatpush1.msra.mxu0 %v540
    %565 = vmatprep.subr.mxu0 0.0
    %566 = vmatpush1.msra.mxu0 %v539
    %567 = vmatprep.subr.mxu0 0.0
    %568 = vmatpush1.msra.mxu0 %v538
    %569 = vmatprep.subr.mxu0 0.0
    %570 = vmatpush1.msra.mxu0 %v537
    %571 = vmatprep.subr.mxu0 0.0
    %572 = vmatpush1.msra.mxu0 %v536
    %573 = vmatprep.subr.mxu0 0.0
    %574 = vmatpush1.msra.mxu0 %v535
    %575 = vmatprep.subr.mxu0 0.0
    %576 = vmatpush1.msra.mxu0 %v534
    %577 = vmatprep.subr.mxu0 0.0
    %578 = vmatpush1.msra.mxu0 %v533
    %579 = vmatprep.subr.mxu0 0.0
    %580 = vmatpush1.msra.mxu0 %v532
    %581 = vmatprep.subr.mxu0 0.0
    %582 = vmatpush1.msra.mxu0 %v531
    %583 = vmatprep.subr.mxu0 0.0
    %584 = vmatpush1.msra.mxu0 %v530
    %585 = vmatprep.subr.mxu0 0.0
    %586 = vmatpush2.msra.mxu0 0.0
    %587 = vmatprep.subr.mxu0 0.0
    %588 = vmatpush2.msra.mxu0 0.0
    %589 = vmatprep.subr.mxu0 0.0
    %590 = vmatpush2.msra.mxu0 0.0
    %591 = vmatprep.subr.mxu0 0.0
    %592 = vmatpush2.msra.mxu0 0.0
    %593 = vmatprep.subr.mxu0 0.0
    %594 = vmatpush2.msra.mxu0 0.0
    %595 = vmatprep.subr.mxu0 0.0
    %596 = vmatpush2.msra.mxu0 0.0
    %597 = vmatprep.subr.mxu0 0.0
    %598 = vmatpush2.msra.mxu0 0.0
    %599 = vmatprep.subr.mxu0 0.0
    %600 = vmatpush2.msra.mxu0 0.0
    %601 = vmatprep.subr.mxu0 0.0
    %602 = vmatpush2.msra.mxu0 0.0
    %603 = vmatprep.subr.mxu0 0.0
    %604 = vmatpush2.msra.mxu0 0.0
    %605 = vmatprep.subr.mxu0 0.0
    %606 = vmatpush2.msra.mxu0 0.0
    %607 = vmatprep.subr.mxu0 0.0
    %608 = vmatpush2.msra.mxu0 0.0
    %609 = vmatprep.subr.mxu0 0.0
    %610 = vmatpush2.msra.mxu0 0.0
    %611 = vmatprep.subr.mxu0 0.0
    %612 = vmatpush2.msra.mxu0 0.0
    %613 = vmatprep.subr.mxu0 0.0
    %614 = vmatpush2.msra.mxu0 0.0
    %615 = vmatprep.subr.mxu0 0.0
    %616 = vmatpush2.msra.mxu0 0.0
    %617 = vmatprep.mubr.f32.mxu0 0.0
    %618 = vmatmul.mubr.f32.gmra.mxu0 %v529
    %v619 = vpop.f32.mrf.mxu0
    %v620 = vadd.f32 %v551, %v619
    %v621 = vpop.f32.mrf.mxu0
    %622 = vdwg.mxu0
    %v623 = vld [vmem:[#allocation14] sm:$0xff]
    %v624 = vld [vmem:[#allocation14 + $0x8] sm:$0xff]
    %v625 = vld [vmem:[#allocation14 + $0x10] sm:$0xff]
    %v626 = vld [vmem:[#allocation14 + $0x18] sm:$0xff]
    %v627 = vld [vmem:[#allocation14 + $0x20] sm:$0xff]
    %v628 = vld [vmem:[#allocation14 + $0x28] sm:$0xff]
    %v629 = vld [vmem:[#allocation14 + $0x30] sm:$0xff]
    %v630 = vld [vmem:[#allocation14 + $0x38] sm:$0xff]
    %v631 = vld [vmem:[#allocation14 + $0x40] sm:$0xff]
    %v632 = vld [vmem:[#allocation14 + $0x48] sm:$0xff]
    %v633 = vld [vmem:[#allocation14 + $0x50] sm:$0xff]
    %v634 = vld [vmem:[#allocation14 + $0x58] sm:$0xff]
    %v635 = vld [vmem:[#allocation14 + $0x60] sm:$0xff]
    %v636 = vld [vmem:[#allocation14 + $0x68] sm:$0xff]
    %v637 = vld [vmem:[#allocation14 + $0x70] sm:$0xff]
    %v638 = vld [vmem:[#allocation14 + $0x78] sm:$0xff]
    %v639 = vld [vmem:[%s13] sm:$0x1]
    %v641 = vlaneseq
    %v642 = vshrl.u32 %v641, 7
    %v643 = vsub.s32 0, %v642
    %v644 = vrot.slane %v639, %v643
    %646 = vmatprep.subr.mxu0 0.0
    %647 = vmatpush1.msra.mxu0 %v638
    %648 = vmatprep.subr.mxu0 0.0
    %649 = vmatpush1.msra.mxu0 %v637
    %650 = vmatprep.subr.mxu0 0.0
    %651 = vmatpush1.msra.mxu0 %v636
    %652 = vmatprep.subr.mxu0 0.0
    %653 = vmatpush1.msra.mxu0 %v635
    %654 = vmatprep.subr.mxu0 0.0
    %655 = vmatpush1.msra.mxu0 %v634
    %656 = vmatprep.subr.mxu0 0.0
    %657 = vmatpush1.msra.mxu0 %v633
    %658 = vmatprep.subr.mxu0 0.0
    %659 = vmatpush1.msra.mxu0 %v632
    %660 = vmatprep.subr.mxu0 0.0
    %661 = vmatpush1.msra.mxu0 %v631
    %662 = vmatprep.subr.mxu0 0.0
    %663 = vmatpush1.msra.mxu0 %v630
    %664 = vmatprep.subr.mxu0 0.0
    %665 = vmatpush1.msra.mxu0 %v629
    %666 = vmatprep.subr.mxu0 0.0
    %667 = vmatpush1.msra.mxu0 %v628
    %668 = vmatprep.subr.mxu0 0.0
    %669 = vmatpush1.msra.mxu0 %v627
    %670 = vmatprep.subr.mxu0 0.0
    %671 = vmatpush1.msra.mxu0 %v626
    %672 = vmatprep.subr.mxu0 0.0
    %673 = vmatpush1.msra.mxu0 %v625
    %674 = vmatprep.subr.mxu0 0.0
    %675 = vmatpush1.msra.mxu0 %v624
    %676 = vmatprep.subr.mxu0 0.0
    %677 = vmatpush1.msra.mxu0 %v623
    %678 = vmatprep.subr.mxu0 0.0
    %679 = vmatpush2.msra.mxu0 0.0
    %680 = vmatprep.subr.mxu0 0.0
    %681 = vmatpush2.msra.mxu0 0.0
    %682 = vmatprep.subr.mxu0 0.0
    %683 = vmatpush2.msra.mxu0 0.0
    %684 = vmatprep.subr.mxu0 0.0
    %685 = vmatpush2.msra.mxu0 0.0
    %686 = vmatprep.subr.mxu0 0.0
    %687 = vmatpush2.msra.mxu0 0.0
    %688 = vmatprep.subr.mxu0 0.0
    %689 = vmatpush2.msra.mxu0 0.0
    %690 = vmatprep.subr.mxu0 0.0
    %691 = vmatpush2.msra.mxu0 0.0
    %692 = vmatprep.subr.mxu0 0.0
    %693 = vmatpush2.msra.mxu0 0.0
    %694 = vmatprep.subr.mxu0 0.0
    %695 = vmatpush2.msra.mxu0 0.0
    %696 = vmatprep.subr.mxu0 0.0
    %697 = vmatpush2.msra.mxu0 0.0
    %698 = vmatprep.subr.mxu0 0.0
    %699 = vmatpush2.msra.mxu0 0.0
    %700 = vmatprep.subr.mxu0 0.0
    %701 = vmatpush2.msra.mxu0 0.0
    %702 = vmatprep.subr.mxu0 0.0
    %703 = vmatpush2.msra.mxu0 0.0
    %704 = vmatprep.subr.mxu0 0.0
    %705 = vmatpush2.msra.mxu0 0.0
    %706 = vmatprep.subr.mxu0 0.0
    %707 = vmatpush2.msra.mxu0 0.0
    %708 = vmatprep.subr.mxu0 0.0
    %709 = vmatpush2.msra.mxu0 0.0
    %710 = vmatprep.mubr.f32.mxu0 0.0
    %711 = vmatmul.mubr.f32.gmra.mxu0 %v620
    %v712 = vpop.f32.mrf.mxu0
    %v713 = vadd.f32 %v644, %v712
    %v714 = vpop.f32.mrf.mxu0
    %715 = vdwg.mxu0
    %v716 = vld [vmem:[#allocation5] sm:$0xff]
    %v717 = vmul.f32 %v713, %v716
    %718 = vst [vmem:[#allocation16] sm:$0xff] %v717
    // Predicated region
    $region90: #{tpu_custom_call.1} parent=1 // pred_check
      _
    $region91: #{tpu_custom_call.1} parent=1 // pred_check_branch
      %720 = sbr.rel (0) target = $region93
    $region92: #{tpu_custom_call.1} parent=1 // pred_region
      %s722 = ssub.s32 128, 128
      %723 = vsyncadd [#allocation4], %s722
      %s725 = sshll.u32 [#allocation16], 4
      %s726 = int_to_ptr.vmem [resolvable:$true] %s725
      %728 = dma.vmem_to_hbm [thread:$0]  %s726, 128, %s14, [#allocation4]
    $region93: #{tpu_custom_call.1} parent=1 // pred_fallthru
      _
    // Predicated region
    $region94: #{tpu_custom_call.1} parent=1 // pred_check
      _
    $region95: #{tpu_custom_call.1} parent=1 // pred_check_branch
      %730 = sbr.rel (0) target = $region97
    $region96: #{tpu_custom_call.1} parent=1 // pred_region
      %731 = dma.done [#allocation4], 128
    $region97: #{tpu_custom_call.1} parent=1 // pred_fallthru
      _
    %732 = vsyncpa [#allocation3], 1
    %733 = vsyncpa [#allocation6], 1
    %734 = vsyncpa [#allocation9], 1
    %735 = vsyncpa [#allocation12], 1
    %736 = vsyncpa [#allocation15], 1
    %737 = vsyncpa [#allocation4], 1

</llo_original>
